<compile_context>
chip_gen: v7x
topology: tpu7x:2x2x1
jax: 0.10.0
libtpu: 0.0.40
codegen_flags: <defaults>
</compile_context>

<pallas_src>
import functools

import jax
import jax.numpy as jnp
from jax import lax
from jax.experimental import pallas as pl
from jax.experimental.pallas import tpu as pltpu


def _round_up(n, m):
    return ((n + m - 1) // m) * m


def jumprelu_kernel(x_ref, w_enc_ref, b_enc_ref, w_dec_ref, b_dec_ref,
                    thr_ref, norm_ref,
                    z_ref, recon_ref, l1_ref, l2_ref,
                    acc_ref, l1_acc_ref,
                    *, batch_valid, tb):
    l = pl.program_id(1)
    n_l = pl.num_programs(1)

    @pl.when(l == 0)
    def _init():
        acc_ref[...] = jnp.zeros_like(acc_ref)
        l1_acc_ref[...] = jnp.zeros_like(l1_acc_ref)

    # Row-validity mask so zero-padded batch rows do not pollute the losses.
    row_ids = pl.program_id(0) * tb + lax.broadcasted_iota(jnp.int32, (tb, 1), 0)
    valid = (row_ids < batch_valid).astype(jnp.float32)            # (TB, 1)

    x = x_ref[...]                                                 # (TB, Dp)

    # ---- encode (this latent tile) ------------------------------------------
    pre = jnp.dot(x, w_enc_ref[...], preferred_element_type=jnp.float32)
    pre = pre + b_enc_ref[...]                                     # (TB, TL) f32
    # Fused JumpReLU: relu(pre * (pre > thr)) == where(pre > thr, max(pre,0), 0)
    f = jnp.where(pre > thr_ref[...], jnp.maximum(pre, 0.0), 0.0)
    z = f * norm_ref[...]                                          # (TB, TL) f32
    z_ref[...] = z.astype(z_ref.dtype)

    # ---- decode: accumulate f @ W_dec over latent tiles (z / norm == f) -----
    acc_ref[...] += jnp.dot(f.astype(w_dec_ref.dtype), w_dec_ref[...],
                            preferred_element_type=jnp.float32)

    # ---- l1 partial sum (masked) --------------------------------------------
    l1_acc_ref[...] += jnp.sum(jnp.abs(z) * valid)

    @pl.when(l == n_l - 1)
    def _finalize():
        recon = acc_ref[...] + b_dec_ref[...]                      # (TB, Dp) f32
        recon_ref[...] = recon.astype(recon_ref.dtype)
        diff = (recon - x.astype(jnp.float32)) * valid             # masked rows
        l1_ref[...] = l1_acc_ref[...].reshape(1, 1, 128)
        l2_ref[...] = jnp.broadcast_to(jnp.sum(diff * diff), (1, 1, 128))


def jumprelu_autoencoder_forward(x, W_enc, b_enc, W_dec, b_dec, threshold,
                                 *, tb=128, tl=256, param_dtype=None):
    """Tiled JumpReLU SAE forward. Returns (latent, output, l1_loss, l2_loss).

    Tile-size guidance at real SAE sizes:
      v6e:  larger latent tiles (tl = 1024-2048) amortize per-step overhead
            (128 MiB physical VMEM); v7x: keep tl <= 512 / tb <= 256 for the
            64 MiB VMEM budget; v5e: 128-aligned contraction tiles already
            saturate the 128x128 MXU.
    """
    B, D = x.shape
    L = W_enc.shape[1]
    out_dtype = x.dtype
    f32 = jnp.float32
    compute_dtype = param_dtype if param_dtype is not None else W_enc.dtype

    # Padded / tile sizes: lane dims to multiples of 128, batch tile to x8.
    TB = min(tb, _round_up(B, 8))
    Bp = _round_up(B, TB)
    Dp = _round_up(D, 128)
    TL = min(tl, _round_up(L, 128))
    Lp = _round_up(L, TL)

    def pad2(a, r, c):
        return jnp.pad(a, ((0, r - a.shape[0]), (0, c - a.shape[1])))

    xp = pad2(x, Bp, Dp)
    w_enc_p = pad2(W_enc.astype(compute_dtype), Dp, Lp)
    w_dec_p = pad2(W_dec.astype(compute_dtype), Lp, Dp)
    b_enc_p = jnp.pad(b_enc.astype(f32), (0, Lp - L)).reshape(1, Lp)
    b_dec_p = jnp.pad(b_dec.astype(f32), (0, Dp - D)).reshape(1, Dp)
    thr_p = jnp.pad(threshold.astype(f32), (0, Lp - L)).reshape(1, Lp)

    # W_dec row norms are a function of weights only: computed once, in f32,
    # outside the kernel.  Padded rows get norm 0 -> padded latents are zero.
    norms = jnp.sqrt(jnp.sum(W_dec.astype(f32) ** 2, axis=1))
    norm_p = jnp.pad(norms, (0, Lp - L)).reshape(1, Lp)

    n_bt = Bp // TB
    n_lt = Lp // TL

    kernel = functools.partial(jumprelu_kernel, batch_valid=B, tb=TB)

    out_shapes = (
        jax.ShapeDtypeStruct((Bp, Lp), f32),          # latent z
        jax.ShapeDtypeStruct((Bp, Dp), out_dtype),    # reconstruction
        jax.ShapeDtypeStruct((n_bt, 1, 128), f32),    # per-batch-tile l1 sums
        jax.ShapeDtypeStruct((n_bt, 1, 128), f32),    # per-batch-tile l2 sums
    )

    z_p, recon_p, l1_part, l2_part = pl.pallas_call(
        kernel,
        out_shape=out_shapes,
        grid_spec=pltpu.PrefetchScalarGridSpec(
            num_scalar_prefetch=0,
            grid=(n_bt, n_lt),
            in_specs=[
                pl.BlockSpec((TB, Dp), lambda b, l: (b, 0)),   # x (resident over l)
                pl.BlockSpec((Dp, TL), lambda b, l: (0, l)),   # W_enc (streamed)
                pl.BlockSpec((1, TL), lambda b, l: (0, l)),    # b_enc
                pl.BlockSpec((TL, Dp), lambda b, l: (l, 0)),   # W_dec (streamed)
                pl.BlockSpec((1, Dp), lambda b, l: (0, 0)),    # b_dec
                pl.BlockSpec((1, TL), lambda b, l: (0, l)),    # threshold
                pl.BlockSpec((1, TL), lambda b, l: (0, l)),    # W_dec row norms
            ],
            out_specs=(
                pl.BlockSpec((TB, TL), lambda b, l: (b, l)),        # z
                pl.BlockSpec((TB, Dp), lambda b, l: (b, 0)),        # recon (resident)
                pl.BlockSpec((1, 1, 128), lambda b, l: (b, 0, 0)),  # l1 partial
                pl.BlockSpec((1, 1, 128), lambda b, l: (b, 0, 0)),  # l2 partial
            ),
            scratch_shapes=[
                pltpu.VMEM((TB, Dp), f32),   # recon accumulator (f32)
                pltpu.VMEM((1, 128), f32),   # l1 partial-sum accumulator
            ],
        ),
        compiler_params=pltpu.CompilerParams(
            dimension_semantics=("parallel", "arbitrary"),
            vmem_limit_bytes=32 * 1024 * 1024,
        ),
    )(xp, w_enc_p, b_enc_p, w_dec_p, b_dec_p, thr_p, norm_p)

    z = z_p[:B, :L]
    recon = recon_p[:B, :D]
    l1 = jnp.sum(l1_part[:, 0, 0]) / (B * L)
    l2 = jnp.sum(l2_part[:, 0, 0]) / (B * D)
    return z, recon, l1, l2


def _reference_forward(x, W_enc, b_enc, W_dec, b_dec, threshold):
    """Pure-JAX reference mirroring the PyTorch module (f32 compute)."""
    x32 = x.astype(jnp.float32)
    pre = x32 @ W_enc.astype(jnp.float32) + b_enc
    f = jnp.maximum(pre * (pre > threshold).astype(jnp.float32), 0.0)
    norm = jnp.sqrt(jnp.sum(W_dec.astype(jnp.float32) ** 2, axis=1))
    z = f * norm
    recon = (z / norm) @ W_dec.astype(jnp.float32) + b_dec
    l1 = jnp.mean(jnp.abs(z))
    l2 = jnp.mean((recon - x32) ** 2)
    return z, recon.astype(x.dtype), l1, l2


if __name__ == "__main__":
    # Small, deliberately unaligned shapes: exercise D/L lane padding, batch
    # padding + loss masking, and a non-trivial (3, 2) grid with accumulation.
    B, D, L = 20, 72, 200
    key = jax.random.PRNGKey(0)
    kx, kwe, kwd, kbe, kbd, kthr = jax.random.split(key, 6)

    x = jax.random.normal(kx, (B, D), dtype=jnp.float32)
    W_enc = 0.1 * jax.random.normal(kwe, (D, L), dtype=jnp.float32)
    b_enc = 0.01 * jax.random.normal(kbe, (L,), dtype=jnp.float32)
    W_dec = 0.1 * jax.random.normal(kwd, (L, D), dtype=jnp.float32)
    b_dec = 0.01 * jax.random.normal(kbd, (D,), dtype=jnp.float32)
    threshold = 0.05 * jax.random.uniform(kthr, (L,), dtype=jnp.float32)

    z, recon, l1, l2 = jumprelu_autoencoder_forward(
        x, W_enc, b_enc, W_dec, b_dec, threshold, tb=8, tl=128)
    jax.block_until_ready((z, recon, l1, l2))

    z_ref, recon_ref, l1_ref, l2_ref = _reference_forward(
        x, W_enc, b_enc, W_dec, b_dec, threshold)

    assert jnp.allclose(z, z_ref, atol=1e-4, rtol=1e-4), "latent mismatch"
    assert jnp.allclose(recon, recon_ref, atol=1e-4, rtol=1e-4), "recon mismatch"
    assert jnp.allclose(l1, l1_ref, atol=1e-5, rtol=1e-4), "l1 mismatch"
    assert jnp.allclose(l2, l2_ref, atol=1e-5, rtol=1e-4), "l2 mismatch"

    print("KERNEL_OK")
</pallas_src>

<mosaic_0001>
module attributes {stable_mosaic.version = 11 : i64} {
  func.func @jumprelu_kernel(%arg0: i32, %arg1: i32, %arg2: memref<8x128xf32, #tpu.memory_space<vmem>>, %arg3: memref<128x128xf32, #tpu.memory_space<vmem>>, %arg4: memref<1x128xf32, #tpu.memory_space<vmem>>, %arg5: memref<128x128xf32, #tpu.memory_space<vmem>>, %arg6: memref<1x128xf32, #tpu.memory_space<vmem>>, %arg7: memref<1x128xf32, #tpu.memory_space<vmem>>, %arg8: memref<1x128xf32, #tpu.memory_space<vmem>>, %arg9: memref<8x128xf32, #tpu.memory_space<vmem>>, %arg10: memref<8x128xf32, #tpu.memory_space<vmem>>, %arg11: memref<1x1x128xf32, #tpu.memory_space<vmem>>, %arg12: memref<1x1x128xf32, #tpu.memory_space<vmem>>, %arg13: memref<8x128xf32, #tpu.memory_space<vmem>>, %arg14: memref<1x128xf32, #tpu.memory_space<vmem>>) attributes {dimension_semantics = [#tpu.dimension_semantics<parallel>, #tpu.dimension_semantics<arbitrary>], iteration_bounds = array<i64: 3, 2>, scalar_prefetch = 0 : i64, scratch_operands = 2 : i64, tpu.core_type = #tpu.core_type<tc>, window_params = [{transform_indices = @transform_0, window_bounds = array<i64: 8, 128>}, {transform_indices = @transform_1, window_bounds = array<i64: 128, 128>}, {transform_indices = @transform_2, window_bounds = array<i64: 1, 128>}, {transform_indices = @transform_3, window_bounds = array<i64: 128, 128>}, {pipeline_mode = #tpu.pipeline_mode<synchronous>, transform_indices = @transform_4, window_bounds = array<i64: 1, 128>}, {transform_indices = @transform_5, window_bounds = array<i64: 1, 128>}, {transform_indices = @transform_6, window_bounds = array<i64: 1, 128>}, {transform_indices = @transform_7, window_bounds = array<i64: 8, 128>}, {transform_indices = @transform_8, window_bounds = array<i64: 8, 128>}, {transform_indices = @transform_9, window_bounds = array<i64: 1, 1, 128>}, {transform_indices = @transform_10, window_bounds = array<i64: 1, 1, 128>}]} {
    %c0_i32 = arith.constant 0 : i32
    %0 = arith.cmpi eq, %arg1, %c0_i32 : i32
    %1 = arith.extui %0 : i1 to i32
    %c0_i32_0 = arith.constant 0 : i32
    %2 = arith.cmpi ne, %1, %c0_i32_0 : i32
    scf.if %2 {
      %cst_27 = arith.constant 0.000000e+00 : f32
      %47 = vector.broadcast %cst_27 : f32 to vector<8x128xf32>
      %c0_28 = arith.constant 0 : index
      %c0_29 = arith.constant 0 : index
      %48 = vector.load %arg13[%c0_28, %c0_29] : memref<8x128xf32, #tpu.memory_space<vmem>>, vector<8x128xf32>
      tpu.vector_store %arg13[%c0_28, %c0_29], %47 {strides = array<i32>} : memref<8x128xf32, #tpu.memory_space<vmem>>, vector<8x128xf32>,
      %cst_30 = arith.constant 0.000000e+00 : f32
      %49 = vector.broadcast %cst_30 : f32 to vector<1x128xf32>
      %c0_31 = arith.constant 0 : index
      %c0_32 = arith.constant 0 : index
      %50 = vector.load %arg14[%c0_31, %c0_32] : memref<1x128xf32, #tpu.memory_space<vmem>>, vector<1x128xf32>
      tpu.vector_store %arg14[%c0_31, %c0_32], %49 {strides = array<i32>} : memref<1x128xf32, #tpu.memory_space<vmem>>, vector<1x128xf32>,
    } else {
    }
    %c8_i32 = arith.constant 8 : i32
    %3 = arith.muli %arg0, %c8_i32 : i32
    %4 = tpu.iota {dimensions = array<i32: 0>} : vector<8x1xi32>
    %5 = vector.broadcast %3 : i32 to vector<8x1xi32>
    %6 = arith.addi %5, %4 : vector<8x1xi32>
    %c20_i32 = arith.constant 20 : i32
    %7 = vector.broadcast %c20_i32 : i32 to vector<8x1xi32>
    %8 = arith.cmpi slt, %6, %7 : vector<8x1xi32>
    %9 = arith.extui %8 : vector<8x1xi1> to vector<8x1xi32>
    %10 = arith.sitofp %9 : vector<8x1xi32> to vector<8x1xf32>
    %c0 = arith.constant 0 : index
    %c0_1 = arith.constant 0 : index
    %11 = vector.load %arg2[%c0, %c0_1] : memref<8x128xf32, #tpu.memory_space<vmem>>, vector<8x128xf32>
    %c0_2 = arith.constant 0 : index
    %c0_3 = arith.constant 0 : index
    %12 = vector.load %arg3[%c0_2, %c0_3] : memref<128x128xf32, #tpu.memory_space<vmem>>, vector<128x128xf32>
    %cst = arith.constant dense<0.000000e+00> : vector<8x128xf32>
    %13 = tpu.matmul %11, %12, %cst {dimension_numbers = #tpu.dot_dimension_numbers<[1], [0], [0], [1], [0, 0, 1, 1], [], []>} : vector<8x128xf32>, vector<128x128xf32>, vector<8x128xf32> -> vector<8x128xf32>
    %c0_4 = arith.constant 0 : index
    %c0_5 = arith.constant 0 : index
    %14 = vector.load %arg4[%c0_4, %c0_5] : memref<1x128xf32, #tpu.memory_space<vmem>>, vector<1x128xf32>
    %15 = vector.broadcast %14 : vector<1x128xf32> to vector<8x128xf32>
    %16 = arith.addf %13, %15 : vector<8x128xf32>
    %c0_6 = arith.constant 0 : index
    %c0_7 = arith.constant 0 : index
    %17 = vector.load %arg7[%c0_6, %c0_7] : memref<1x128xf32, #tpu.memory_space<vmem>>, vector<1x128xf32>
    %18 = vector.broadcast %17 : vector<1x128xf32> to vector<8x128xf32>
    %19 = arith.cmpf ogt, %16, %18 : vector<8x128xf32>
    %cst_8 = arith.constant 0.000000e+00 : f32
    %20 = vector.broadcast %cst_8 : f32 to vector<8x128xf32>
    %21 = arith.maximumf %16, %20 : vector<8x128xf32>
    %cst_9 = arith.constant 0.000000e+00 : f32
    %22 = vector.broadcast %cst_9 : f32 to vector<8x128xf32>
    %23 = arith.select %19, %21, %22 : vector<8x128xi1>, vector<8x128xf32>
    %c0_10 = arith.constant 0 : index
    %c0_11 = arith.constant 0 : index
    %24 = vector.load %arg8[%c0_10, %c0_11] : memref<1x128xf32, #tpu.memory_space<vmem>>, vector<1x128xf32>
    %25 = vector.broadcast %24 : vector<1x128xf32> to vector<8x128xf32>
    %26 = arith.mulf %23, %25 : vector<8x128xf32>
    %c0_12 = arith.constant 0 : index
    %c0_13 = arith.constant 0 : index
    %27 = vector.load %arg9[%c0_12, %c0_13] : memref<8x128xf32, #tpu.memory_space<vmem>>, vector<8x128xf32>
    tpu.vector_store %arg9[%c0_12, %c0_13], %26 {strides = array<i32>} : memref<8x128xf32, #tpu.memory_space<vmem>>, vector<8x128xf32>,
    %c0_14 = arith.constant 0 : index
    %c0_15 = arith.constant 0 : index
    %28 = vector.load %arg13[%c0_14, %c0_15] : memref<8x128xf32, #tpu.memory_space<vmem>>, vector<8x128xf32>
    %c0_16 = arith.constant 0 : index
    %c0_17 = arith.constant 0 : index
    %29 = vector.load %arg5[%c0_16, %c0_17] : memref<128x128xf32, #tpu.memory_space<vmem>>, vector<128x128xf32>
    %cst_18 = arith.constant dense<0.000000e+00> : vector<8x128xf32>
    %30 = tpu.matmul %23, %29, %cst_18 {dimension_numbers = #tpu.dot_dimension_numbers<[1], [0], [0], [1], [0, 0, 1, 1], [], []>} : vector<8x128xf32>, vector<128x128xf32>, vector<8x128xf32> -> vector<8x128xf32>
    %31 = arith.addf %28, %30 : vector<8x128xf32>
    %c0_19 = arith.constant 0 : index
    %c0_20 = arith.constant 0 : index
    %32 = vector.load %arg13[%c0_19, %c0_20] : memref<8x128xf32, #tpu.memory_space<vmem>>, vector<8x128xf32>
    tpu.vector_store %arg13[%c0_19, %c0_20], %31 {strides = array<i32>} : memref<8x128xf32, #tpu.memory_space<vmem>>, vector<8x128xf32>,
    %c0_21 = arith.constant 0 : index
    %c0_22 = arith.constant 0 : index
    %33 = vector.load %arg14[%c0_21, %c0_22] : memref<1x128xf32, #tpu.memory_space<vmem>>, vector<1x128xf32>
    %34 = math.absf %26 : vector<8x128xf32>
    %35 = vector.broadcast %10 : vector<8x1xf32> to vector<8x128xf32>
    %36 = arith.mulf %34, %35 : vector<8x128xf32>
    %37 = vector.shape_cast %36 : vector<8x128xf32> to vector<1x8x128xf32>
    %cst_23 = arith.constant dense<0.000000e+00> : vector<1xf32>
    %38 = vector.multi_reduction <add>, %37, %cst_23 [1, 2] : vector<1x8x128xf32> to vector<1xf32>
    %39 = vector.shape_cast %38 : vector<1xf32> to vector<1x1x1xf32>
    %40 = vector.extract %39[0, 0, 0] : f32 from vector<1x1x1xf32>
    %41 = vector.broadcast %40 : f32 to vector<1x128xf32>
    %42 = arith.addf %33, %41 : vector<1x128xf32>
    %c0_24 = arith.constant 0 : index
    %c0_25 = arith.constant 0 : index
    %43 = vector.load %arg14[%c0_24, %c0_25] : memref<1x128xf32, #tpu.memory_space<vmem>>, vector<1x128xf32>
    tpu.vector_store %arg14[%c0_24, %c0_25], %42 {strides = array<i32>} : memref<1x128xf32, #tpu.memory_space<vmem>>, vector<1x128xf32>,
    %c1_i32 = arith.constant 1 : i32
    %44 = arith.cmpi eq, %arg1, %c1_i32 : i32
    %45 = arith.extui %44 : i1 to i32
    %c0_i32_26 = arith.constant 0 : i32
    %46 = arith.cmpi ne, %45, %c0_i32_26 : i32
    scf.if %46 {
      %c0_27 = arith.constant 0 : index
      %c0_28 = arith.constant 0 : index
      %47 = vector.load %arg13[%c0_27, %c0_28] : memref<8x128xf32, #tpu.memory_space<vmem>>, vector<8x128xf32>
      %c0_29 = arith.constant 0 : index
      %c0_30 = arith.constant 0 : index
      %48 = vector.load %arg6[%c0_29, %c0_30] : memref<1x128xf32, #tpu.memory_space<vmem>>, vector<1x128xf32>
      %49 = vector.broadcast %48 : vector<1x128xf32> to vector<8x128xf32>
      %50 = arith.addf %47, %49 : vector<8x128xf32>
      %c0_31 = arith.constant 0 : index
      %c0_32 = arith.constant 0 : index
      %51 = vector.load %arg10[%c0_31, %c0_32] : memref<8x128xf32, #tpu.memory_space<vmem>>, vector<8x128xf32>
      tpu.vector_store %arg10[%c0_31, %c0_32], %50 {strides = array<i32>} : memref<8x128xf32, #tpu.memory_space<vmem>>, vector<8x128xf32>,
      %52 = arith.subf %50, %11 : vector<8x128xf32>
      %53 = vector.broadcast %10 : vector<8x1xf32> to vector<8x128xf32>
      %54 = arith.mulf %52, %53 : vector<8x128xf32>
      %c0_33 = arith.constant 0 : index
      %c0_34 = arith.constant 0 : index
      %55 = vector.load %arg14[%c0_33, %c0_34] : memref<1x128xf32, #tpu.memory_space<vmem>>, vector<1x128xf32>
      %56 = vector.shape_cast %55 : vector<1x128xf32> to vector<1x1x128xf32>
      %c0_35 = arith.constant 0 : index
      %c0_36 = arith.constant 0 : index
      %c0_37 = arith.constant 0 : index
      %57 = vector.load %arg11[%c0_35, %c0_36, %c0_37] : memref<1x1x128xf32, #tpu.memory_space<vmem>>, vector<1x1x128xf32>
      tpu.vector_store %arg11[%c0_35, %c0_36, %c0_37], %56 {strides = array<i32>} : memref<1x1x128xf32, #tpu.memory_space<vmem>>, vector<1x1x128xf32>,
      %58 = arith.mulf %54, %54 : vector<8x128xf32>
      %59 = vector.shape_cast %58 : vector<8x128xf32> to vector<1x8x128xf32>
      %cst_38 = arith.constant dense<0.000000e+00> : vector<1xf32>
      %60 = vector.multi_reduction <add>, %59, %cst_38 [1, 2] : vector<1x8x128xf32> to vector<1xf32>
      %61 = vector.shape_cast %60 : vector<1xf32> to vector<1x1x1xf32>
      %62 = vector.extract %61[0, 0, 0] : f32 from vector<1x1x1xf32>
      %63 = vector.broadcast %62 : f32 to vector<1x1x128xf32>
      %c0_39 = arith.constant 0 : index
      %c0_40 = arith.constant 0 : index
      %c0_41 = arith.constant 0 : index
      %64 = vector.load %arg12[%c0_39, %c0_40, %c0_41] : memref<1x1x128xf32, #tpu.memory_space<vmem>>, vector<1x1x128xf32>
      tpu.vector_store %arg12[%c0_39, %c0_40, %c0_41], %63 {strides = array<i32>} : memref<1x1x128xf32, #tpu.memory_space<vmem>>, vector<1x1x128xf32>,
    } else {
    }
    return
  }
  func.func @transform_0(%arg0: i32, %arg1: i32) -> (i32, i32) {
    %c0_i32 = arith.constant 0 : i32
    %c0_i32_0 = arith.constant 0 : i32
    return %arg0, %c0_i32 : i32, i32
  }
  func.func @transform_1(%arg0: i32, %arg1: i32) -> (i32, i32) {
    %c0_i32 = arith.constant 0 : i32
    %c0_i32_0 = arith.constant 0 : i32
    return %c0_i32, %arg1 : i32, i32
  }
  func.func @transform_2(%arg0: i32, %arg1: i32) -> (i32, i32) {
    %c0_i32 = arith.constant 0 : i32
    %c0_i32_0 = arith.constant 0 : i32
    return %c0_i32, %arg1 : i32, i32
  }
  func.func @transform_3(%arg0: i32, %arg1: i32) -> (i32, i32) {
    %c0_i32 = arith.constant 0 : i32
    %c0_i32_0 = arith.constant 0 : i32
    return %arg1, %c0_i32 : i32, i32
  }
  func.func @transform_4(%arg0: i32, %arg1: i32) -> (i32, i32) {
    %c0_i32 = arith.constant 0 : i32
    %c0_i32_0 = arith.constant 0 : i32
    %c0_i32_1 = arith.constant 0 : i32
    return %c0_i32, %c0_i32_0 : i32, i32
  }
  func.func @transform_5(%arg0: i32, %arg1: i32) -> (i32, i32) {
    %c0_i32 = arith.constant 0 : i32
    %c0_i32_0 = arith.constant 0 : i32
    return %c0_i32, %arg1 : i32, i32
  }
  func.func @transform_6(%arg0: i32, %arg1: i32) -> (i32, i32) {
    %c0_i32 = arith.constant 0 : i32
    %c0_i32_0 = arith.constant 0 : i32
    return %c0_i32, %arg1 : i32, i32
  }
  func.func @transform_7(%arg0: i32, %arg1: i32) -> (i32, i32) {
    %c0_i32 = arith.constant 0 : i32
    return %arg0, %arg1 : i32, i32
  }
  func.func @transform_8(%arg0: i32, %arg1: i32) -> (i32, i32) {
    %c0_i32 = arith.constant 0 : i32
    %c0_i32_0 = arith.constant 0 : i32
    return %arg0, %c0_i32 : i32, i32
  }
  func.func @transform_9(%arg0: i32, %arg1: i32) -> (i32, i32, i32) {
    %c0_i32 = arith.constant 0 : i32
    %c0_i32_0 = arith.constant 0 : i32
    %c0_i32_1 = arith.constant 0 : i32
    return %arg0, %c0_i32, %c0_i32_0 : i32, i32, i32
  }
  func.func @transform_10(%arg0: i32, %arg1: i32) -> (i32, i32, i32) {
    %c0_i32 = arith.constant 0 : i32
    %c0_i32_0 = arith.constant 0 : i32
    %c0_i32_1 = arith.constant 0 : i32
    return %arg0, %c0_i32, %c0_i32_0 : i32, i32, i32
  }
}

</mosaic_0001>

<llo_original>
// kernel: tpu_custom_call.1
$region0: #{tpu_custom_call.1}
  #allocation0 [shape = 'u32[]', space=smem, size = 0x4, offset = 0x4, fixed_abs, tag = 'smem constant byte address 0x4 - core index']
  #allocation1 [shape = 'u32[144,128]{1,0:T(1,128)}', space=vmem, size = 0x12000, scoped, tag = 'internal scratch']
  #allocation2 [shape = 'f32[8,128]{1,0:T(8,128)}', space=vmem, size = 0x1000, scoped, tag = 'scratch operand']
  #allocation3 [shape = 'f32[1,128]{1,0:T(1,128)}', space=vmem, size = 0x200, scoped, tag = 'scratch operand']
  %s0 = inlined_call_operand.hbm [shape: f32[24,128], index: 0, kind: input, shape index: {}]
  %s1 = inlined_call_operand.hbm [shape: f32[128,256], index: 1, kind: input, shape index: {}]
  %s2 = inlined_call_operand.vmem [shape: f32[1,256], index: 2, kind: input, shape index: {}]
  %s3 = inlined_call_operand.hbm [shape: f32[256,128], index: 3, kind: input, shape index: {}]
  %s4 = inlined_call_operand.vmem [shape: f32[1,128], index: 4, kind: input, shape index: {}]
  %s5 = inlined_call_operand.vmem [shape: f32[1,256], index: 5, kind: input, shape index: {}]
  %s6 = inlined_call_operand.vmem [shape: f32[1,256], index: 6, kind: input, shape index: {}]
  %s7 = inlined_call_operand.hbm [shape: f32[24,256], index: 7, kind: output, shape index: {0}]
  %s8 = inlined_call_operand.hbm [shape: f32[24,128], index: 8, kind: output, shape index: {1}]
  %s9 = inlined_call_operand.hbm [shape: f32[3,1,128], index: 9, kind: output, shape index: {2}]
  %s10 = inlined_call_operand.hbm [shape: f32[3,1,128], index: 10, kind: output, shape index: {3}]
  %11 = xla_tuple %s7, %s8, %s9, %s10
  %s12 = sld [smem:[#allocation0]]
  $region105: #{tpu_custom_call.1} parent=0
    _
  %s14 = ssub.s32 1, %s12
  %s15 = scalar_select 0, %s14, %s12
  $region1: #{tpu_custom_call.1} parent=0
    #allocation4 [shape = 'u8[8192]{0}', space=vmem, size = 0x2000, scoped, tag = 'input window, operand 0']
    #allocation5 [shape = 's32[2]{0}', space=sflag, size = 0x8, scoped, tag = 'scoped memory for tpu_custom_call.1']
    #allocation6 [shape = 's32[2]{0}', space=sflag, size = 0x8, scoped, tag = 'scoped memory for tpu_custom_call.1']
    #allocation7 [shape = 'u8[131072]{0}', space=vmem, size = 0x20000, scoped, tag = 'input window, operand 1']
    #allocation8 [shape = 's32[2]{0}', space=sflag, size = 0x8, scoped, tag = 'scoped memory for tpu_custom_call.1']
    #allocation9 [shape = 'u8[131072]{0}', space=vmem, size = 0x20000, scoped, tag = 'input window, operand 3']
    #allocation10 [shape = 'u8[8192]{0}', space=vmem, size = 0x2000, scoped, tag = 'output window, operand 0']
    #allocation11 [shape = 'u8[8192]{0}', space=vmem, size = 0x2000, scoped, tag = 'output window, operand 1']
    #allocation12 [shape = 's32[2]{0}', space=sflag, size = 0x8, scoped, tag = 'scoped memory for tpu_custom_call.1']
    #allocation13 [shape = 'u8[1024]{0}', space=vmem, size = 0x400, scoped, tag = 'output window, operand 2']
    #allocation14 [shape = 'u8[1024]{0}', space=vmem, size = 0x400, scoped, tag = 'output window, operand 3']
    #allocation15 [shape = 's32[2]{0}', space=sflag, size = 0x8, scoped, tag = 'scoped memory for tpu_custom_call.1']
    %16 = vsyncpa [#allocation5], 0
    %s17 = scalar_lea.sflag [#allocation5], 1
    %18 = vsyncpa %s17, 0
    %19 = vsyncpa [#allocation8], 0
    %s20 = scalar_lea.sflag [#allocation8], 1
    %21 = vsyncpa %s20, 0
    %22 = vsyncpa [#allocation6], 0
    %s23 = scalar_lea.sflag [#allocation6], 1
    %24 = vsyncpa %s23, 0
    %25 = vsyncpa [#allocation12], 0
    %s26 = scalar_lea.sflag [#allocation12], 1
    %27 = vsyncpa %s26, 0
    %28 = vsyncpa [#allocation15], 0
    %s29 = scalar_lea.sflag [#allocation15], 1
    %30 = vsyncpa %s29, 0
    loop: start=0, step=1, limit=8
    $region2: #{tpu_custom_call.1} parent=1 // loop_pre_header
      _
    $region3: #{tpu_custom_call.1} parent=1 // loop_header
      %s32 = sphi 0, %s36
      %p33 = scmp.ge.s32.totalorder %s32, 8
      %s39 = sphi 0, %s51
      %s40 = sphi 0, %s47
      %s41 = sphi 0, %s39
      %s42 = sphi 0, %s40
      %s43 = sphi 0, %s41
      %s44 = sphi 0, %s42
      %s54 = sphi 0, %s56
      %s57 = sphi 0, %s54
      %s58 = sphi 0, %s57
      %s74 = sphi 0, %s58
      %s80 = sphi 0, %s82
      %s83 = sphi 0, %s80
      %s84 = sphi 0, %s83
      %s100 = sphi 0, %s84
      %s106 = sphi 0, %s108
      %s109 = sphi 0, %s106
      %s110 = sphi 0, %s109
      %s126 = sphi 0, %s110
      %s132 = sphi 0, %s134
      %s135 = sphi 0, %s132
      %s136 = sphi 0, %s135
      %s152 = sphi 0, %s136
      %s156 = sphi 0, %s156
      %s158 = sphi 0, %s156
      %s159 = sphi 0, %s158
      %s173 = sphi 0, %s159
      %s179 = sphi 0, %s181
      %s182 = sphi 0, %s179
      %s183 = sphi 0, %s182
      %s199 = sphi 0, %s183
      %s205 = sphi 0, %s207
      %s208 = sphi 0, %s205
      %s209 = sphi 0, %s208
      %s225 = sphi 0, %s209
      %s233 = sphi 0, %s235
      %s236 = sphi 0, %s233
      %s237 = sphi 0, %s236
      %s253 = sphi 0, %s237
      %s259 = sphi 0, %s261
      %s262 = sphi 0, %s259
      %s263 = sphi 0, %s262
      %s279 = sphi 0, %s263
      %s285 = sphi 0, %s287
      %s288 = sphi 0, %s285
      %s289 = sphi 0, %s288
      %s305 = sphi 0, %s289
      %s311 = sphi 0, %s313
      %s314 = sphi 0, %s311
      %s315 = sphi 0, %s314
      %s331 = sphi 0, %s315
    $region4: #{tpu_custom_call.1} parent=1 // loop_header_branch
      %35 = sbr.rel (%p33) target = $region8
    $region5: #{tpu_custom_call.1} parent=1 // loop_body
      %s37 = ssub.s32 %s32, 1
      %s38 = ssub.s32 %s32, 2
      %s45 = sadd.s32 1, %s40
      %p46 = scmp.ge.s32.totalorder %s45, 2
      %s47 = scalar_select %p46, 0, %s45
      %s48 = sadd.s32 1, %s39
      %s49 = scalar_select %p46, %s48, %s39
      %p50 = scmp.ge.s32.totalorder %s49, 3
      %s51 = scalar_select %p50, 0, %s49
      %s52 = ssub.s32 %s39, %s51
      %p53 = scmp.eq.s32.totalorder %s52, 0
      %s55 = sadd.s32 %s54, 1
      %s56 = scalar_select %p53, %s54, %s55
      %p59 = pneg %p53
      %p60 = scmp.eq.s32.totalorder %s32, 5
      %p61 = por %p59, %p60
      %p62 = scmp.ne.s32.totalorder %s54, %s57
      %p63 = scmp.eq.s32.totalorder %s32, 0
      %p64 = por %p62, %p63
      %p65 = scmp.ne.s32.totalorder %s54, %s57
      %p66 = scmp.eq.s32.totalorder %s37, 5
      %p67 = por %p65, %p66
      %p68 = scmp.ne.s32.totalorder %s57, %s58
      %p69 = scmp.eq.s32.totalorder %s37, 0
      %p70 = por %p68, %p69
      %p71 = scmp.ne.s32.totalorder %s57, %s58
      %p72 = scmp.eq.s32.totalorder %s38, 5
      %p73 = por %p71, %p72
      %p75 = scmp.ne.s32.totalorder %s58, %s74
      %p76 = scmp.eq.s32.totalorder %s38, 0
      %p77 = por %p75, %p76
      %s78 = ssub.s32 %s40, %s47
      %p79 = scmp.eq.s32.totalorder %s78, 0
      %s81 = sadd.s32 %s80, 1
      %s82 = scalar_select %p79, %s80, %s81
      %p85 = pneg %p79
      %p86 = scmp.eq.s32.totalorder %s32, 5
      %p87 = por %p85, %p86
      %p88 = scmp.ne.s32.totalorder %s80, %s83
      %p89 = scmp.eq.s32.totalorder %s32, 0
      %p90 = por %p88, %p89
      %p91 = scmp.ne.s32.totalorder %s80, %s83
      %p92 = scmp.eq.s32.totalorder %s37, 5
      %p93 = por %p91, %p92
      %p94 = scmp.ne.s32.totalorder %s83, %s84
      %p95 = scmp.eq.s32.totalorder %s37, 0
      %p96 = por %p94, %p95
      %p97 = scmp.ne.s32.totalorder %s83, %s84
      %p98 = scmp.eq.s32.totalorder %s38, 5
      %p99 = por %p97, %p98
      %p101 = scmp.ne.s32.totalorder %s84, %s100
      %p102 = scmp.eq.s32.totalorder %s38, 0
      %p103 = por %p101, %p102
      %s104 = ssub.s32 %s40, %s47
      %p105 = scmp.eq.s32.totalorder %s104, 0
      %s107 = sadd.s32 %s106, 1
      %s108 = scalar_select %p105, %s106, %s107
      %p111 = pneg %p105
      %p112 = scmp.eq.s32.totalorder %s32, 5
      %p113 = por %p111, %p112
      %p114 = scmp.ne.s32.totalorder %s106, %s109
      %p115 = scmp.eq.s32.totalorder %s32, 0
      %p116 = por %p114, %p115
      %p117 = scmp.ne.s32.totalorder %s106, %s109
      %p118 = scmp.eq.s32.totalorder %s37, 5
      %p119 = por %p117, %p118
      %p120 = scmp.ne.s32.totalorder %s109, %s110
      %p121 = scmp.eq.s32.totalorder %s37, 0
      %p122 = por %p120, %p121
      %p123 = scmp.ne.s32.totalorder %s109, %s110
      %p124 = scmp.eq.s32.totalorder %s38, 5
      %p125 = por %p123, %p124
      %p127 = scmp.ne.s32.totalorder %s110, %s126
      %p128 = scmp.eq.s32.totalorder %s38, 0
      %p129 = por %p127, %p128
      %s130 = ssub.s32 %s40, %s47
      %p131 = scmp.eq.s32.totalorder %s130, 0
      %s133 = sadd.s32 %s132, 1
      %s134 = scalar_select %p131, %s132, %s133
      %p137 = pneg %p131
      %p138 = scmp.eq.s32.totalorder %s32, 5
      %p139 = por %p137, %p138
      %p140 = scmp.ne.s32.totalorder %s132, %s135
      %p141 = scmp.eq.s32.totalorder %s32, 0
      %p142 = por %p140, %p141
      %p143 = scmp.ne.s32.totalorder %s132, %s135
      %p144 = scmp.eq.s32.totalorder %s37, 5
      %p145 = por %p143, %p144
      %p146 = scmp.ne.s32.totalorder %s135, %s136
      %p147 = scmp.eq.s32.totalorder %s37, 0
      %p148 = por %p146, %p147
      %p149 = scmp.ne.s32.totalorder %s135, %s136
      %p150 = scmp.eq.s32.totalorder %s38, 5
      %p151 = por %p149, %p150
      %p153 = scmp.ne.s32.totalorder %s136, %s152
      %p154 = scmp.eq.s32.totalorder %s38, 0
      %p155 = por %p153, %p154
      %s157 = sadd.s32 %s156, 1
      %p160 = scmp.eq.s32.totalorder %s32, 5
      %p161 = scmp.ne.s32.totalorder %s156, %s158
      %p162 = scmp.eq.s32.totalorder %s32, 0
      %p163 = por %p161, %p162
      %p164 = scmp.ne.s32.totalorder %s156, %s158
      %p165 = scmp.eq.s32.totalorder %s37, 5
      %p166 = por %p164, %p165
      %p167 = scmp.ne.s32.totalorder %s158, %s159
      %p168 = scmp.eq.s32.totalorder %s37, 0
      %p169 = por %p167, %p168
      %p170 = scmp.ne.s32.totalorder %s158, %s159
      %p171 = scmp.eq.s32.totalorder %s38, 5
      %p172 = por %p170, %p171
      %p174 = scmp.ne.s32.totalorder %s159, %s173
      %p175 = scmp.eq.s32.totalorder %s38, 0
      %p176 = por %p174, %p175
      %s177 = ssub.s32 %s40, %s47
      %p178 = scmp.eq.s32.totalorder %s177, 0
      %s180 = sadd.s32 %s179, 1
      %s181 = scalar_select %p178, %s179, %s180
      %p184 = pneg %p178
      %p185 = scmp.eq.s32.totalorder %s32, 5
      %p186 = por %p184, %p185
      %p187 = scmp.ne.s32.totalorder %s179, %s182
      %p188 = scmp.eq.s32.totalorder %s32, 0
      %p189 = por %p187, %p188
      %p190 = scmp.ne.s32.totalorder %s179, %s182
      %p191 = scmp.eq.s32.totalorder %s37, 5
      %p192 = por %p190, %p191
      %p193 = scmp.ne.s32.totalorder %s182, %s183
      %p194 = scmp.eq.s32.totalorder %s37, 0
      %p195 = por %p193, %p194
      %p196 = scmp.ne.s32.totalorder %s182, %s183
      %p197 = scmp.eq.s32.totalorder %s38, 5
      %p198 = por %p196, %p197
      %p200 = scmp.ne.s32.totalorder %s183, %s199
      %p201 = scmp.eq.s32.totalorder %s38, 0
      %p202 = por %p200, %p201
      %s203 = ssub.s32 %s40, %s47
      %p204 = scmp.eq.s32.totalorder %s203, 0
      %s206 = sadd.s32 %s205, 1
      %s207 = scalar_select %p204, %s205, %s206
      %p210 = pneg %p204
      %p211 = scmp.eq.s32.totalorder %s32, 5
      %p212 = por %p210, %p211
      %p213 = scmp.ne.s32.totalorder %s205, %s208
      %p214 = scmp.eq.s32.totalorder %s32, 0
      %p215 = por %p213, %p214
      %p216 = scmp.ne.s32.totalorder %s205, %s208
      %p217 = scmp.eq.s32.totalorder %s37, 5
      %p218 = por %p216, %p217
      %p219 = scmp.ne.s32.totalorder %s208, %s209
      %p220 = scmp.eq.s32.totalorder %s37, 0
      %p221 = por %p219, %p220
      %p222 = scmp.ne.s32.totalorder %s208, %s209
      %p223 = scmp.eq.s32.totalorder %s38, 5
      %p224 = por %p222, %p223
      %p226 = scmp.ne.s32.totalorder %s209, %s225
      %p227 = scmp.eq.s32.totalorder %s38, 0
      %p228 = por %p226, %p227
      %s229 = ssub.s32 %s39, %s51
      %s230 = ssub.s32 %s40, %s47
      %s231 = sor.u32 %s229, %s230
      %p232 = scmp.eq.s32.totalorder %s231, 0
      %s234 = sadd.s32 %s233, 1
      %s235 = scalar_select %p232, %s233, %s234
      %p238 = pneg %p232
      %p239 = scmp.eq.s32.totalorder %s32, 5
      %p240 = por %p238, %p239
      %p241 = scmp.ne.s32.totalorder %s233, %s236
      %p242 = scmp.eq.s32.totalorder %s32, 0
      %p243 = por %p241, %p242
      %p244 = scmp.ne.s32.totalorder %s233, %s236
      %p245 = scmp.eq.s32.totalorder %s37, 5
      %p246 = por %p244, %p245
      %p247 = scmp.ne.s32.totalorder %s236, %s237
      %p248 = scmp.eq.s32.totalorder %s37, 0
      %p249 = por %p247, %p248
      %p250 = scmp.ne.s32.totalorder %s236, %s237
      %p251 = scmp.eq.s32.totalorder %s38, 5
      %p252 = por %p250, %p251
      %p254 = scmp.ne.s32.totalorder %s237, %s253
      %p255 = scmp.eq.s32.totalorder %s38, 0
      %p256 = por %p254, %p255
      %s257 = ssub.s32 %s39, %s51
      %p258 = scmp.eq.s32.totalorder %s257, 0
      %s260 = sadd.s32 %s259, 1
      %s261 = scalar_select %p258, %s259, %s260
      %p264 = pneg %p258
      %p265 = scmp.eq.s32.totalorder %s32, 5
      %p266 = por %p264, %p265
      %p267 = scmp.ne.s32.totalorder %s259, %s262
      %p268 = scmp.eq.s32.totalorder %s32, 0
      %p269 = por %p267, %p268
      %p270 = scmp.ne.s32.totalorder %s259, %s262
      %p271 = scmp.eq.s32.totalorder %s37, 5
      %p272 = por %p270, %p271
      %p273 = scmp.ne.s32.totalorder %s262, %s263
      %p274 = scmp.eq.s32.totalorder %s37, 0
      %p275 = por %p273, %p274
      %p276 = scmp.ne.s32.totalorder %s262, %s263
      %p277 = scmp.eq.s32.totalorder %s38, 5
      %p278 = por %p276, %p277
      %p280 = scmp.ne.s32.totalorder %s263, %s279
      %p281 = scmp.eq.s32.totalorder %s38, 0
      %p282 = por %p280, %p281
      %s283 = ssub.s32 %s39, %s51
      %p284 = scmp.eq.s32.totalorder %s283, 0
      %s286 = sadd.s32 %s285, 1
      %s287 = scalar_select %p284, %s285, %s286
      %p290 = pneg %p284
      %p291 = scmp.eq.s32.totalorder %s32, 5
      %p292 = por %p290, %p291
      %p293 = scmp.ne.s32.totalorder %s285, %s288
      %p294 = scmp.eq.s32.totalorder %s32, 0
      %p295 = por %p293, %p294
      %p296 = scmp.ne.s32.totalorder %s285, %s288
      %p297 = scmp.eq.s32.totalorder %s37, 5
      %p298 = por %p296, %p297
      %p299 = scmp.ne.s32.totalorder %s288, %s289
      %p300 = scmp.eq.s32.totalorder %s37, 0
      %p301 = por %p299, %p300
      %p302 = scmp.ne.s32.totalorder %s288, %s289
      %p303 = scmp.eq.s32.totalorder %s38, 5
      %p304 = por %p302, %p303
      %p306 = scmp.ne.s32.totalorder %s289, %s305
      %p307 = scmp.eq.s32.totalorder %s38, 0
      %p308 = por %p306, %p307
      %s309 = ssub.s32 %s39, %s51
      %p310 = scmp.eq.s32.totalorder %s309, 0
      %s312 = sadd.s32 %s311, 1
      %s313 = scalar_select %p310, %s311, %s312
      %p316 = pneg %p310
      %p317 = scmp.eq.s32.totalorder %s32, 5
      %p318 = por %p316, %p317
      %p319 = scmp.ne.s32.totalorder %s311, %s314
      %p320 = scmp.eq.s32.totalorder %s32, 0
      %p321 = por %p319, %p320
      %p322 = scmp.ne.s32.totalorder %s311, %s314
      %p323 = scmp.eq.s32.totalorder %s37, 5
      %p324 = por %p322, %p323
      %p325 = scmp.ne.s32.totalorder %s314, %s315
      %p326 = scmp.eq.s32.totalorder %s37, 0
      %p327 = por %p325, %p326
      %p328 = scmp.ne.s32.totalorder %s314, %s315
      %p329 = scmp.eq.s32.totalorder %s38, 5
      %p330 = por %p328, %p329
      %p332 = scmp.ne.s32.totalorder %s315, %s331
      %p333 = scmp.eq.s32.totalorder %s38, 0
      %p334 = por %p332, %p333
      %p335 = scmp.le.s32.totalorder 1, %s32
      %p336 = scmp.lt.s32.totalorder %s32, 7
      %p337 = pnand %p335, %p336
      %p338 = pneg %p337
      // Predicated region
      $region9: #{tpu_custom_call.1} parent=5 // pred_check
        _
      $region10: #{tpu_custom_call.1} parent=5 // pred_check_branch
        %340 = sbr.rel (%p337) target = $region12
      $region11: #{tpu_custom_call.1} parent=5 // pred_region
        %s341 = ssub.s32 %s32, 1
        // Predicated region
        $region13: #{tpu_custom_call.1} parent=11 // pred_check
          %p342 = pneg %p169
        $region14: #{tpu_custom_call.1} parent=11 // pred_check_branch
          %344 = sbr.rel (%p342) target = $region16
        $region15: #{tpu_custom_call.1} parent=11 // pred_region
          _
        $region16: #{tpu_custom_call.1} parent=11 // pred_fallthru
          _
      $region12: #{tpu_custom_call.1} parent=5 // pred_fallthru
        _
      %p345 = scmp.lt.s32.totalorder %s32, 6
      // Predicated region
      $region17: #{tpu_custom_call.1} parent=5 // pred_check
        %p346 = pneg %p345
      $region18: #{tpu_custom_call.1} parent=5 // pred_check_branch
        %348 = sbr.rel (%p346) target = $region20
      $region19: #{tpu_custom_call.1} parent=5 // pred_region
        // Predicated region
        $region21: #{tpu_custom_call.1} parent=19 // pred_check
          %p349 = pneg %p64
        $region22: #{tpu_custom_call.1} parent=19 // pred_check_branch
          %351 = sbr.rel (%p349) target = $region24
        $region23: #{tpu_custom_call.1} parent=19 // pred_region
          %s352 = sand.u32 %s54, 1
          %s353 = scalar_lea.sflag [#allocation5], %s352
          %s354 = sand.u32 %s54, 1
          %s355 = smul.addr %s354, 8
          %s356 = scalar_lea.vmem [#allocation4], %s355
          %s358 = ssub.s32 128, 128
          %359 = vsyncadd %s353, %s358
          %s360 = smul.addr %s39, 128
          %s361 = scalar_lea.hbm %s0, %s360
          %s363 = sshll.u32 %s356, 4
          %s364 = int_to_ptr.vmem [resolvable:$true] %s363
          %366 = dma.hbm_to_vmem [thread:$0]  %s361, 128, %s364, %s353
        $region24: #{tpu_custom_call.1} parent=19 // pred_fallthru
          _
        // Predicated region
        $region25: #{tpu_custom_call.1} parent=19 // pred_check
          %p367 = pneg %p90
        $region26: #{tpu_custom_call.1} parent=19 // pred_check_branch
          %369 = sbr.rel (%p367) target = $region28
        $region27: #{tpu_custom_call.1} parent=19 // pred_region
          %s370 = sand.u32 %s32, 1
          %s371 = scalar_lea.sflag [#allocation8], %s370
          %s372 = sand.u32 %s80, 1
          %s373 = smul.addr %s372, 128
          %s374 = scalar_lea.vmem [#allocation7], %s373
          %s376 = ssub.s32 2048, 2048
          %377 = vsyncadd %s371, %s376
          %s378 = smul.addr %s40, 128
          %s379 = scalar_lea.hbm %s1, %s378
          %s380 = sshll.u32 %s374, 4
          %s381 = int_to_ptr.vmem [resolvable:$true] %s380
          %386 = dma.hbm_to_vmem [thread:$0]  %s379, 2048, %s381, %s371, 256, 128, 8
        $region28: #{tpu_custom_call.1} parent=19 // pred_fallthru
          _
        // Predicated region
        $region29: #{tpu_custom_call.1} parent=19 // pred_check
          %p387 = pneg %p116
        $region30: #{tpu_custom_call.1} parent=19 // pred_check_branch
          %389 = sbr.rel (%p387) target = $region32
        $region31: #{tpu_custom_call.1} parent=19 // pred_region
          %p390 = scmp.lt.s32.totalorder %s40, 1
          %s391 = scalar_select %p390, %s40, 1
          %s392 = scalar_lea.vmem %s2, %s391
        $region32: #{tpu_custom_call.1} parent=19 // pred_fallthru
          _
        // Predicated region
        $region33: #{tpu_custom_call.1} parent=19 // pred_check
          %p393 = pneg %p142
        $region34: #{tpu_custom_call.1} parent=19 // pred_check_branch
          %395 = sbr.rel (%p393) target = $region36
        $region35: #{tpu_custom_call.1} parent=19 // pred_region
          %s396 = sand.u32 %s32, 1
          %s397 = scalar_lea.sflag [#allocation8], %s396
          %s398 = sand.u32 %s132, 1
          %s399 = smul.addr %s398, 128
          %s400 = scalar_lea.vmem [#allocation9], %s399
          %s401 = smul.u32 16, %s40
          %s403 = ssub.s32 2048, 2048
          %404 = vsyncadd %s397, %s403
          %s405 = smul.addr %s401, 128
          %s406 = scalar_lea.hbm %s3, %s405
          %s407 = sshll.u32 %s400, 4
          %s408 = int_to_ptr.vmem [resolvable:$true] %s407
          %413 = dma.hbm_to_vmem [thread:$0]  %s406, 2048, %s408, %s397, 128, 128, 8
        $region36: #{tpu_custom_call.1} parent=19 // pred_fallthru
          _
        // Predicated region
        $region37: #{tpu_custom_call.1} parent=19 // pred_check
          %p414 = pneg %p189
        $region38: #{tpu_custom_call.1} parent=19 // pred_check_branch
          %416 = sbr.rel (%p414) target = $region40
        $region39: #{tpu_custom_call.1} parent=19 // pred_region
          %p417 = scmp.lt.s32.totalorder %s40, 1
          %s418 = scalar_select %p417, %s40, 1
          %s419 = scalar_lea.vmem %s5, %s418
        $region40: #{tpu_custom_call.1} parent=19 // pred_fallthru
          _
        // Predicated region
        $region41: #{tpu_custom_call.1} parent=19 // pred_check
          %p420 = pneg %p215
        $region42: #{tpu_custom_call.1} parent=19 // pred_check_branch
          %422 = sbr.rel (%p420) target = $region44
        $region43: #{tpu_custom_call.1} parent=19 // pred_region
          %p423 = scmp.lt.s32.totalorder %s40, 1
          %s424 = scalar_select %p423, %s40, 1
          %s425 = scalar_lea.vmem %s6, %s424
        $region44: #{tpu_custom_call.1} parent=19 // pred_fallthru
          _
      $region20: #{tpu_custom_call.1} parent=5 // pred_fallthru
        _
      %p426 = scmp.le.s32.totalorder 1, %s32
      %p427 = scmp.lt.s32.totalorder %s32, 7
      %p428 = pnand %p426, %p427
      %p429 = pneg %p428
      // Predicated region
      $region45: #{tpu_custom_call.1} parent=5 // pred_check
        _
      $region46: #{tpu_custom_call.1} parent=5 // pred_check_branch
        %431 = sbr.rel (%p428) target = $region48
      $region47: #{tpu_custom_call.1} parent=5 // pred_region
        %s432 = ssub.s32 %s32, 1
        %s433 = sand.u32 %s57, 1
        %s434 = scalar_lea.sflag [#allocation5], %s433
        %s435 = sand.u32 %s57, 1
        %s436 = smul.addr %s435, 8
        %s437 = scalar_lea.vmem [#allocation4], %s436
        // Predicated region
        $region49: #{tpu_custom_call.1} parent=47 // pred_check
          %p438 = pneg %p70
        $region50: #{tpu_custom_call.1} parent=47 // pred_check_branch
          %440 = sbr.rel (%p438) target = $region52
        $region51: #{tpu_custom_call.1} parent=47 // pred_region
          %441 = dma.done %s434, 128
        $region52: #{tpu_custom_call.1} parent=47 // pred_fallthru
          _
        %s442 = sand.u32 %s37, 1
        %s443 = scalar_lea.sflag [#allocation8], %s442
        %s444 = sand.u32 %s83, 1
        %s445 = smul.addr %s444, 128
        %s446 = scalar_lea.vmem [#allocation7], %s445
        // Predicated region
        $region53: #{tpu_custom_call.1} parent=47 // pred_check
          %p447 = pneg %p96
        $region54: #{tpu_custom_call.1} parent=47 // pred_check_branch
          %449 = sbr.rel (%p447) target = $region56
        $region55: #{tpu_custom_call.1} parent=47 // pred_region
          %450 = dma.done %s443, 2048
        $region56: #{tpu_custom_call.1} parent=47 // pred_fallthru
          _
        %s451 = sand.u32 %s37, 1
        %s452 = scalar_lea.sflag [#allocation8], %s451
        %s453 = sand.u32 %s135, 1
        %s454 = smul.addr %s453, 128
        %s455 = scalar_lea.vmem [#allocation9], %s454
        // Predicated region
        $region57: #{tpu_custom_call.1} parent=47 // pred_check
          %p456 = pneg %p148
        $region58: #{tpu_custom_call.1} parent=47 // pred_check_branch
          %458 = sbr.rel (%p456) target = $region60
        $region59: #{tpu_custom_call.1} parent=47 // pred_region
          %459 = dma.done %s452, 2048
        $region60: #{tpu_custom_call.1} parent=47 // pred_fallthru
          _
        %s460 = sand.u32 %s57, 1
        %s461 = scalar_lea.sflag [#allocation5], %s460
        %s462 = sand.u32 %s57, 1
        %s463 = smul.addr %s462, 8
        %s464 = scalar_lea.vmem [#allocation4], %s463
        %p465 = pneg %p70
        %p466 = pneg %p67
        %s467 = sand.u32 %s37, 1
        %s468 = scalar_lea.sflag [#allocation8], %s467
        %s469 = sand.u32 %s83, 1
        %s470 = smul.addr %s469, 128
        %s471 = scalar_lea.vmem [#allocation7], %s470
        %p472 = pneg %p96
        %p473 = pneg %p93
        %p474 = scmp.lt.s32.totalorder %s42, 1
        %s475 = scalar_select %p474, %s42, 1
        %s476 = scalar_lea.vmem %s2, %s475
        %p477 = pneg %p122
        %p478 = pneg %p119
        %s479 = sand.u32 %s37, 1
        %s480 = scalar_lea.sflag [#allocation8], %s479
        %s481 = sand.u32 %s135, 1
        %s482 = smul.addr %s481, 128
        %s483 = scalar_lea.vmem [#allocation9], %s482
        %p484 = pneg %p148
        %p485 = pneg %p145
        %p486 = pneg %p169
        %p487 = pneg %p166
        %p488 = scmp.lt.s32.totalorder %s42, 1
        %s489 = scalar_select %p488, %s42, 1
        %s490 = scalar_lea.vmem %s5, %s489
        %p491 = pneg %p195
        %p492 = pneg %p192
        %p493 = scmp.lt.s32.totalorder %s42, 1
        %s494 = scalar_select %p493, %s42, 1
        %s495 = scalar_lea.vmem %s6, %s494
        %p496 = pneg %p221
        %p497 = pneg %p218
        %p498 = pneg %p249
        %p499 = pneg %p246
        %s500 = sand.u32 %s236, 1
        %s501 = scalar_lea.sflag [#allocation6], %s500
        %s502 = sand.u32 %s236, 1
        %s503 = smul.addr %s502, 8
        %s504 = scalar_lea.vmem [#allocation10], %s503
        %p505 = pneg %p275
        %p506 = pneg %p272
        %s507 = sand.u32 %s37, 1
        %s508 = scalar_lea.sflag [#allocation12], %s507
        %s509 = sand.u32 %s262, 1
        %s510 = smul.addr %s509, 8
        %s511 = scalar_lea.vmem [#allocation11], %s510
        %p512 = pneg %p301
        %p513 = pneg %p298
        %s514 = sand.u32 %s37, 1
        %s515 = scalar_lea.sflag [#allocation12], %s514
        %s516 = sand.u32 %s288, 1
        %s517 = scalar_lea.vmem [#allocation13], %s516
        %p518 = pneg %p327
        %p519 = pneg %p324
        %s520 = sand.u32 %s314, 1
        %s521 = scalar_lea.sflag [#allocation15], %s520
        %s522 = sand.u32 %s314, 1
        %s523 = scalar_lea.vmem [#allocation14], %s522
        %p524 = scmp.lt.s32.totalorder %s42, 1
        %s525 = scalar_select %p524, %s42, 1
        %s526 = scalar_lea.vmem %s2, %s525
        %s527 = smul.u32 16, %s42
        %p528 = scmp.lt.s32.totalorder %s42, 1
        %s529 = scalar_select %p528, %s42, 1
        %s530 = scalar_lea.vmem %s5, %s529
        %p531 = scmp.lt.s32.totalorder %s42, 1
        %s532 = scalar_select %p531, %s42, 1
        %s533 = scalar_lea.vmem %s6, %s532
        %p534 = scmp.eq.s32.totalorder %s42, 0
        // Predicated region
        $region61: #{tpu_custom_call.1} parent=47 // pred_check
          %p535 = pneg %p534
        $region62: #{tpu_custom_call.1} parent=47 // pred_check_branch
          %537 = sbr.rel (%p535) target = $region64
        $region63: #{tpu_custom_call.1} parent=47 // pred_region
          %538 = vst [vmem:[#allocation2] sm:$0xff] 0.0
          %539 = vst [vmem:[#allocation3] sm:$0x1] 0.0
        $region64: #{tpu_custom_call.1} parent=47 // pred_fallthru
          _
        %s540 = smul.u32 %s41, 8
        %v541 = vlaneseq
        %v542 = vshrl.u32 %v541, 7
        %v543 = vstv %s540
        %v544 = vadd.s32 %v543, %v542
        %vm545 = vcmp.lt.s32.totalorder %v544, 20
        %v546 = vsel %vm545, 1, 0
        %v547 = vcvt.s32.f32 %v546
        %v548 = vld [vmem:[%s437] sm:$0xff]
        %v549 = vld [vmem:[%s446] sm:$0xff]
        %v550 = vld [vmem:[%s446 + $0x8] sm:$0xff]
        %v551 = vld [vmem:[%s446 + $0x10] sm:$0xff]
        %v552 = vld [vmem:[%s446 + $0x18] sm:$0xff]
        %v553 = vld [vmem:[%s446 + $0x20] sm:$0xff]
        %v554 = vld [vmem:[%s446 + $0x28] sm:$0xff]
        %v555 = vld [vmem:[%s446 + $0x30] sm:$0xff]
        %v556 = vld [vmem:[%s446 + $0x38] sm:$0xff]
        %v557 = vld [vmem:[%s446 + $0x40] sm:$0xff]
        %v558 = vld [vmem:[%s446 + $0x48] sm:$0xff]
        %v559 = vld [vmem:[%s446 + $0x50] sm:$0xff]
        %v560 = vld [vmem:[%s446 + $0x58] sm:$0xff]
        %v561 = vld [vmem:[%s446 + $0x60] sm:$0xff]
        %v562 = vld [vmem:[%s446 + $0x68] sm:$0xff]
        %v563 = vld [vmem:[%s446 + $0x70] sm:$0xff]
        %v564 = vld [vmem:[%s446 + $0x78] sm:$0xff]
        %v565 = vld [vmem:[%s526] sm:$0x1]
        %v567 = vlaneseq
        %v568 = vshrl.u32 %v567, 7
        %v569 = vsub.s32 0, %v568
        %v570 = vrot.slane %v565, %v569
        %572 = vmatprep.subr.mxu0 0.0
        %573 = vmatpush1.msra.mxu0 %v549
        %574 = vmatprep.subr.mxu0 0.0
        %575 = vmatpush1.msra.mxu0 %v550
        %576 = vmatprep.subr.mxu0 0.0
        %577 = vmatpush1.msra.mxu0 %v551
        %578 = vmatprep.subr.mxu0 0.0
        %579 = vmatpush1.msra.mxu0 %v552
        %580 = vmatprep.subr.mxu0 0.0
        %581 = vmatpush1.msra.mxu0 %v553
        %582 = vmatprep.subr.mxu0 0.0
        %583 = vmatpush1.msra.mxu0 %v554
        %584 = vmatprep.subr.mxu0 0.0
        %585 = vmatpush1.msra.mxu0 %v555
        %586 = vmatprep.subr.mxu0 0.0
        %587 = vmatpush1.msra.mxu0 %v556
        %588 = vmatprep.subr.mxu0 0.0
        %589 = vmatpush1.msra.mxu0 %v557
        %590 = vmatprep.subr.mxu0 0.0
        %591 = vmatpush1.msra.mxu0 %v558
        %592 = vmatprep.subr.mxu0 0.0
        %593 = vmatpush1.msra.mxu0 %v559
        %594 = vmatprep.subr.mxu0 0.0
        %595 = vmatpush1.msra.mxu0 %v560
        %596 = vmatprep.subr.mxu0 0.0
        %597 = vmatpush1.msra.mxu0 %v561
        %598 = vmatprep.subr.mxu0 0.0
        %599 = vmatpush1.msra.mxu0 %v562
        %600 = vmatprep.subr.mxu0 0.0
        %601 = vmatpush1.msra.mxu0 %v563
        %602 = vmatprep.subr.mxu0 0.0
        %603 = vmatpush1.msra.mxu0 %v564
        %604 = vmatprep.subr.mxu0 0.0
        %605 = vmatpush1.msra.mxu0 0.0
        %606 = vmatprep.subr.mxu0 0.0
        %607 = vmatpush1.msra.mxu0 0.0
        %608 = vmatprep.subr.mxu0 0.0
        %609 = vmatpush1.msra.mxu0 0.0
        %610 = vmatprep.subr.mxu0 0.0
        %611 = vmatpush1.msra.mxu0 0.0
        %612 = vmatprep.subr.mxu0 0.0
        %613 = vmatpush1.msra.mxu0 0.0
        %614 = vmatprep.subr.mxu0 0.0
        %615 = vmatpush1.msra.mxu0 0.0
        %616 = vmatprep.subr.mxu0 0.0
        %617 = vmatpush1.msra.mxu0 0.0
        %618 = vmatprep.subr.mxu0 0.0
        %619 = vmatpush1.msra.mxu0 0.0
        %620 = vmatprep.subr.mxu0 0.0
        %621 = vmatpush1.msra.mxu0 0.0
        %622 = vmatprep.subr.mxu0 0.0
        %623 = vmatpush1.msra.mxu0 0.0
        %624 = vmatprep.subr.mxu0 0.0
        %625 = vmatpush1.msra.mxu0 0.0
        %626 = vmatprep.subr.mxu0 0.0
        %627 = vmatpush1.msra.mxu0 0.0
        %628 = vmatprep.subr.mxu0 0.0
        %629 = vmatpush1.msra.mxu0 0.0
        %630 = vmatprep.subr.mxu0 0.0
        %631 = vmatpush1.msra.mxu0 0.0
        %632 = vmatprep.subr.mxu0 0.0
        %633 = vmatpush1.msra.mxu0 0.0
        %634 = vmatprep.subr.mxu0 0.0
        %635 = vmatpush1.msra.mxu0 0.0
        %636 = vmatprep.mubr.f32.mxu0 0.0
        %637 = vmatmul.mubr.f32.gmra.mrb[0].mxu0 %v548
        %v638 = vpop.f32.mrb[0].mxu0
        %v639 = vadd.f32 %v570, %v638
        %v640 = vpop.f32.mrb[0].mxu0
        %641 = vdwg.mxu0
        %v642 = vld [vmem:[%s530] sm:$0x1]
        %v644 = vlaneseq
        %v645 = vshrl.u32 %v644, 7
        %v646 = vsub.s32 0, %v645
        %v647 = vrot.slane %v642, %v646
        %vm649 = vcmp.gt.f32.partialorder %v639, %v647
        %v650 = vmax.f32 %v639, 0.0
        %v651 = vsel %vm649, %v650, 0.0
        %v652 = vld [vmem:[%s533] sm:$0x1]
        %v654 = vlaneseq
        %v655 = vshrl.u32 %v654, 7
        %v656 = vsub.s32 0, %v655
        %v657 = vrot.slane %v652, %v656
        %v659 = vmul.f32 %v651, %v657
        %660 = vst [vmem:[%s504] sm:$0xff] %v659
        %v661 = vld [vmem:[#allocation2] sm:$0xff]
        %v662 = vld [vmem:[%s455] sm:$0xff]
        %v663 = vld [vmem:[%s455 + $0x8] sm:$0xff]
        %v664 = vld [vmem:[%s455 + $0x10] sm:$0xff]
        %v665 = vld [vmem:[%s455 + $0x18] sm:$0xff]
        %v666 = vld [vmem:[%s455 + $0x20] sm:$0xff]
        %v667 = vld [vmem:[%s455 + $0x28] sm:$0xff]
        %v668 = vld [vmem:[%s455 + $0x30] sm:$0xff]
        %v669 = vld [vmem:[%s455 + $0x38] sm:$0xff]
        %v670 = vld [vmem:[%s455 + $0x40] sm:$0xff]
        %v671 = vld [vmem:[%s455 + $0x48] sm:$0xff]
        %v672 = vld [vmem:[%s455 + $0x50] sm:$0xff]
        %v673 = vld [vmem:[%s455 + $0x58] sm:$0xff]
        %v674 = vld [vmem:[%s455 + $0x60] sm:$0xff]
        %v675 = vld [vmem:[%s455 + $0x68] sm:$0xff]
        %v676 = vld [vmem:[%s455 + $0x70] sm:$0xff]
        %v677 = vld [vmem:[%s455 + $0x78] sm:$0xff]
        %678 = vmatprep.subr.mxu0 0.0
        %679 = vmatpush1.msra.mxu0 %v662
        %680 = vmatprep.subr.mxu0 0.0
        %681 = vmatpush1.msra.mxu0 %v663
        %682 = vmatprep.subr.mxu0 0.0
        %683 = vmatpush1.msra.mxu0 %v664
        %684 = vmatprep.subr.mxu0 0.0
        %685 = vmatpush1.msra.mxu0 %v665
        %686 = vmatprep.subr.mxu0 0.0
        %687 = vmatpush1.msra.mxu0 %v666
        %688 = vmatprep.subr.mxu0 0.0
        %689 = vmatpush1.msra.mxu0 %v667
        %690 = vmatprep.subr.mxu0 0.0
        %691 = vmatpush1.msra.mxu0 %v668
        %692 = vmatprep.subr.mxu0 0.0
        %693 = vmatpush1.msra.mxu0 %v669
        %694 = vmatprep.subr.mxu0 0.0
        %695 = vmatpush1.msra.mxu0 %v670
        %696 = vmatprep.subr.mxu0 0.0
        %697 = vmatpush1.msra.mxu0 %v671
        %698 = vmatprep.subr.mxu0 0.0
        %699 = vmatpush1.msra.mxu0 %v672
        %700 = vmatprep.subr.mxu0 0.0
        %701 = vmatpush1.msra.mxu0 %v673
        %702 = vmatprep.subr.mxu0 0.0
        %703 = vmatpush1.msra.mxu0 %v674
        %704 = vmatprep.subr.mxu0 0.0
        %705 = vmatpush1.msra.mxu0 %v675
        %706 = vmatprep.subr.mxu0 0.0
        %707 = vmatpush1.msra.mxu0 %v676
        %708 = vmatprep.subr.mxu0 0.0
        %709 = vmatpush1.msra.mxu0 %v677
        %710 = vmatprep.subr.mxu0 0.0
        %711 = vmatpush1.msra.mxu0 0.0
        %712 = vmatprep.subr.mxu0 0.0
        %713 = vmatpush1.msra.mxu0 0.0
        %714 = vmatprep.subr.mxu0 0.0
        %715 = vmatpush1.msra.mxu0 0.0
        %716 = vmatprep.subr.mxu0 0.0
        %717 = vmatpush1.msra.mxu0 0.0
        %718 = vmatprep.subr.mxu0 0.0
        %719 = vmatpush1.msra.mxu0 0.0
        %720 = vmatprep.subr.mxu0 0.0
        %721 = vmatpush1.msra.mxu0 0.0
        %722 = vmatprep.subr.mxu0 0.0
        %723 = vmatpush1.msra.mxu0 0.0
        %724 = vmatprep.subr.mxu0 0.0
        %725 = vmatpush1.msra.mxu0 0.0
        %726 = vmatprep.subr.mxu0 0.0
        %727 = vmatpush1.msra.mxu0 0.0
        %728 = vmatprep.subr.mxu0 0.0
        %729 = vmatpush1.msra.mxu0 0.0
        %730 = vmatprep.subr.mxu0 0.0
        %731 = vmatpush1.msra.mxu0 0.0
        %732 = vmatprep.subr.mxu0 0.0
        %733 = vmatpush1.msra.mxu0 0.0
        %734 = vmatprep.subr.mxu0 0.0
        %735 = vmatpush1.msra.mxu0 0.0
        %736 = vmatprep.subr.mxu0 0.0
        %737 = vmatpush1.msra.mxu0 0.0
        %738 = vmatprep.subr.mxu0 0.0
        %739 = vmatpush1.msra.mxu0 0.0
        %740 = vmatprep.subr.mxu0 0.0
        %741 = vmatpush1.msra.mxu0 0.0
        %742 = vmatprep.mubr.f32.mxu0 0.0
        %743 = vmatmul.mubr.f32.gmra.mrb[0].mxu0 %v651
        %v744 = vpop.f32.mrb[0].mxu0
        %v745 = vadd.f32 0.0, %v744
        %v746 = vpop.f32.mrb[0].mxu0
        %747 = vdwg.mxu0
        %v748 = vadd.f32 %v661, %v745
        %749 = vst [vmem:[#allocation2] sm:$0xff] %v748
        %v750 = vld [vmem:[#allocation3] sm:$0x1]
        %v751 = vand.u32 2147483647, %v659
        %v752 = vmul.f32 %v751, %v547
        %753 = vadd.xlane.f32.xlu0 %v752
        %v754 = vpop.xlane.xlu0 %753
        %v755 = vrot.slane %v754, 4
        %v756 = vadd.f32 %v754, %v755
        %v757 = vrot.slane %v756, 2
        %v758 = vadd.f32 %v756, %v757
        %v759 = vrot.slane %v758, 1
        %v760 = vadd.f32 %v758, %v759
        %s761 = vtos %v760
        %v762 = vstv %s761
        %v763 = vadd.f32 %v750, %v762
        %764 = vst [vmem:[#allocation3] sm:$0x1] %v763
        %p765 = scmp.eq.s32.totalorder %s42, 1
        // Predicated region
        $region65: #{tpu_custom_call.1} parent=47 // pred_check
          %p766 = pneg %p765
        $region66: #{tpu_custom_call.1} parent=47 // pred_check_branch
          %768 = sbr.rel (%p766) target = $region68
        $region67: #{tpu_custom_call.1} parent=47 // pred_region
          %v769 = vld [vmem:[#allocation2] sm:$0xff]
          %v770 = vld [vmem:[%s4] sm:$0x1]
          %v772 = vlaneseq
          %v773 = vshrl.u32 %v772, 7
          %v774 = vsub.s32 0, %v773
          %v775 = vrot.slane %v770, %v774
          %v777 = vadd.f32 %v769, %v775
          %778 = vst [vmem:[%s511] sm:$0xff] %v777
          %v779 = vsub.f32 %v777, %v548
          %v780 = vmul.f32 %v779, %v547
          %v781 = vld [vmem:[#allocation3] sm:$0x1]
          %782 = vst [vmem:[%s517] sm:$0x1] %v781
          %v783 = vmul.f32 %v780, %v780
          %784 = vadd.xlane.f32.xlu0 %v783
          %v785 = vpop.xlane.xlu0 %784
          %v786 = vrot.slane %v785, 4
          %v787 = vadd.f32 %v785, %v786
          %v788 = vrot.slane %v787, 2
          %v789 = vadd.f32 %v787, %v788
          %v790 = vrot.slane %v789, 1
          %v791 = vadd.f32 %v789, %v790
          %s792 = vtos %v791
          %v793 = vstv %s792
          %794 = vst [vmem:[%s523] sm:$0x1] %v793
        $region68: #{tpu_custom_call.1} parent=47 // pred_fallthru
          _
        %s795 = sand.u32 %s236, 1
        %s796 = scalar_lea.sflag [#allocation6], %s795
        %s797 = sand.u32 %s236, 1
        %s798 = smul.addr %s797, 8
        %s799 = scalar_lea.vmem [#allocation10], %s798
        %s800 = sand.u32 %s37, 1
        %s801 = scalar_lea.sflag [#allocation12], %s800
        %s802 = sand.u32 %s262, 1
        %s803 = smul.addr %s802, 8
        %s804 = scalar_lea.vmem [#allocation11], %s803
        %s805 = sand.u32 %s37, 1
        %s806 = scalar_lea.sflag [#allocation12], %s805
        %s807 = sand.u32 %s288, 1
        %s808 = scalar_lea.vmem [#allocation13], %s807
        %s809 = sand.u32 %s314, 1
        %s810 = scalar_lea.sflag [#allocation15], %s809
        %s811 = sand.u32 %s314, 1
        %s812 = scalar_lea.vmem [#allocation14], %s811
        // Predicated region
        $region69: #{tpu_custom_call.1} parent=47 // pred_check
          %p813 = pneg %p246
        $region70: #{tpu_custom_call.1} parent=47 // pred_check_branch
          %815 = sbr.rel (%p813) target = $region72
        $region71: #{tpu_custom_call.1} parent=47 // pred_region
          %s817 = ssub.s32 128, 128
          %818 = vsyncadd %s796, %s817
          %s819 = smul.addr %s41, 2
          %s820 = sadd.s32 %s42, %s819
          %s821 = smul.addr %s820, 128
          %s822 = scalar_lea.hbm %s7, %s821
          %s824 = sshll.u32 %s799, 4
          %s825 = int_to_ptr.vmem [resolvable:$true] %s824
          %827 = dma.vmem_to_hbm [thread:$0]  %s825, 128, %s822, %s796
        $region72: #{tpu_custom_call.1} parent=47 // pred_fallthru
          _
        // Predicated region
        $region73: #{tpu_custom_call.1} parent=47 // pred_check
          %p828 = pneg %p272
        $region74: #{tpu_custom_call.1} parent=47 // pred_check_branch
          %830 = sbr.rel (%p828) target = $region76
        $region75: #{tpu_custom_call.1} parent=47 // pred_region
          %s832 = ssub.s32 128, 128
          %833 = vsyncadd %s801, %s832
          %s834 = smul.addr %s41, 128
          %s835 = scalar_lea.hbm %s8, %s834
          %s837 = sshll.u32 %s804, 4
          %s838 = int_to_ptr.vmem [resolvable:$true] %s837
          %840 = dma.vmem_to_hbm [thread:$0]  %s838, 128, %s835, %s801
        $region76: #{tpu_custom_call.1} parent=47 // pred_fallthru
          _
        // Predicated region
        $region77: #{tpu_custom_call.1} parent=47 // pred_check
          %p841 = pneg %p298
        $region78: #{tpu_custom_call.1} parent=47 // pred_check_branch
          %843 = sbr.rel (%p841) target = $region80
        $region79: #{tpu_custom_call.1} parent=47 // pred_region
          %s845 = ssub.s32 16, 16
          %846 = vsyncadd %s806, %s845
          %s847 = smul.addr %s41, 16
          %s848 = scalar_lea.hbm %s9, %s847
          %s850 = sshll.u32 %s808, 4
          %s851 = int_to_ptr.vmem [resolvable:$true] %s850
          %853 = dma.vmem_to_hbm [thread:$0]  %s851, 16, %s848, %s806
        $region80: #{tpu_custom_call.1} parent=47 // pred_fallthru
          _
        // Predicated region
        $region81: #{tpu_custom_call.1} parent=47 // pred_check
          %p854 = pneg %p324
        $region82: #{tpu_custom_call.1} parent=47 // pred_check_branch
          %856 = sbr.rel (%p854) target = $region84
        $region83: #{tpu_custom_call.1} parent=47 // pred_region
          %s858 = ssub.s32 16, 16
          %859 = vsyncadd %s810, %s858
          %s860 = smul.addr %s41, 16
          %s861 = scalar_lea.hbm %s10, %s860
          %s863 = sshll.u32 %s812, 4
          %s864 = int_to_ptr.vmem [resolvable:$true] %s863
          %866 = dma.vmem_to_hbm [thread:$0]  %s864, 16, %s861, %s810
        $region84: #{tpu_custom_call.1} parent=47 // pred_fallthru
          _
      $region48: #{tpu_custom_call.1} parent=5 // pred_fallthru
        _
      %p867 = scmp.le.s32.totalorder 2, %s32
      // Predicated region
      $region85: #{tpu_custom_call.1} parent=5 // pred_check
        %p868 = pneg %p867
      $region86: #{tpu_custom_call.1} parent=5 // pred_check_branch
        %870 = sbr.rel (%p868) target = $region88
      $region87: #{tpu_custom_call.1} parent=5 // pred_region
        %s871 = ssub.s32 %s32, 2
        // Predicated region
        $region89: #{tpu_custom_call.1} parent=87 // pred_check
          %p872 = pneg %p252
        $region90: #{tpu_custom_call.1} parent=87 // pred_check_branch
          %874 = sbr.rel (%p872) target = $region92
        $region91: #{tpu_custom_call.1} parent=87 // pred_region
          %s875 = sand.u32 %s237, 1
          %s876 = scalar_lea.sflag [#allocation6], %s875
          %s877 = sand.u32 %s237, 1
          %s878 = smul.addr %s877, 8
          %s879 = scalar_lea.vmem [#allocation10], %s878
          %880 = dma.done %s876, 128
        $region92: #{tpu_custom_call.1} parent=87 // pred_fallthru
          _
        // Predicated region
        $region93: #{tpu_custom_call.1} parent=87 // pred_check
          %p881 = pneg %p278
        $region94: #{tpu_custom_call.1} parent=87 // pred_check_branch
          %883 = sbr.rel (%p881) target = $region96
        $region95: #{tpu_custom_call.1} parent=87 // pred_region
          %s884 = sand.u32 %s38, 1
          %s885 = scalar_lea.sflag [#allocation12], %s884
          %s886 = sand.u32 %s263, 1
          %s887 = smul.addr %s886, 8
          %s888 = scalar_lea.vmem [#allocation11], %s887
          %889 = dma.done %s885, 128
        $region96: #{tpu_custom_call.1} parent=87 // pred_fallthru
          _
        // Predicated region
        $region97: #{tpu_custom_call.1} parent=87 // pred_check
          %p890 = pneg %p304
        $region98: #{tpu_custom_call.1} parent=87 // pred_check_branch
          %892 = sbr.rel (%p890) target = $region100
        $region99: #{tpu_custom_call.1} parent=87 // pred_region
          %s893 = sand.u32 %s38, 1
          %s894 = scalar_lea.sflag [#allocation12], %s893
          %s895 = sand.u32 %s289, 1
          %s896 = scalar_lea.vmem [#allocation13], %s895
          %897 = dma.done %s894, 16
        $region100: #{tpu_custom_call.1} parent=87 // pred_fallthru
          _
        // Predicated region
        $region101: #{tpu_custom_call.1} parent=87 // pred_check
          %p898 = pneg %p330
        $region102: #{tpu_custom_call.1} parent=87 // pred_check_branch
          %900 = sbr.rel (%p898) target = $region104
        $region103: #{tpu_custom_call.1} parent=87 // pred_region
          %s901 = sand.u32 %s315, 1
          %s902 = scalar_lea.sflag [#allocation15], %s901
          %s903 = sand.u32 %s315, 1
          %s904 = scalar_lea.vmem [#allocation14], %s903
          %905 = dma.done %s902, 16
        $region104: #{tpu_custom_call.1} parent=87 // pred_fallthru
          _
      $region88: #{tpu_custom_call.1} parent=5 // pred_fallthru
        _
    $region6: #{tpu_custom_call.1} parent=1 // loop_footer
      %s36 = sadd.s32 1, %s32
    $region7: #{tpu_custom_call.1} parent=1 // loop_footer_branch
      %31 = sbr.rel target = $region3
    $region8: #{tpu_custom_call.1} parent=1 // loop_exit
      _
    %906 = vsyncpa [#allocation5], 1
    %s907 = scalar_lea.sflag [#allocation5], 1
    %908 = vsyncpa %s907, 1
    %909 = vsyncpa [#allocation8], 1
    %s910 = scalar_lea.sflag [#allocation8], 1
    %911 = vsyncpa %s910, 1
    %912 = vsyncpa [#allocation6], 1
    %s913 = scalar_lea.sflag [#allocation6], 1
    %914 = vsyncpa %s913, 1
    %915 = vsyncpa [#allocation12], 1
    %s916 = scalar_lea.sflag [#allocation12], 1
    %917 = vsyncpa %s916, 1
    %918 = vsyncpa [#allocation15], 1
    %s919 = scalar_lea.sflag [#allocation15], 1
    %920 = vsyncpa %s919, 1

</llo_original>
